<compile_context>
chip_gen: v7x
topology: tpu7x:2x2x1
jax: 0.10.0
libtpu: 0.0.40
codegen_flags: <defaults>
</compile_context>

<pallas_src>
import math

import jax
import jax.numpy as jnp
from jax.experimental import pallas as pl
from jax.experimental.pallas import tpu as pltpu

_LANE = 128
_SUBLANE = 8
_TILE_TARGET_BYTES = 4 << 20          # ~4 MiB per x/out block
_VMEM_LIMIT_BYTES = 32 * 1024 * 1024  # >= live usage (~24 MiB); <= physical on v5e/v6e/v7x
_MIN_PALLAS_BYTES = 256 * 1024        # below this, fused jnp add beats a kernel launch
_MIN_GRID_STEPS = 4                   # keep pipeline + both v7x TensorCores busy


def _get_pe(length: int, d_model: int) -> jnp.ndarray:
    """Sinusoidal positional-encoding buffer (matches the torch implementation)."""
    assert d_model % 2 == 0, "PositionalEncoding requires an even d_model (same as torch impl)"
    position = jnp.arange(0, length, dtype=jnp.float32)[:, None]                 # (L, 1)
    div_term = jnp.exp(
        jnp.arange(0, d_model, 2, dtype=jnp.float32) * (-math.log(10000.0) / d_model)
    )                                                                            # (D//2,)
    angles = position * div_term                                                 # (L, D//2)
    pe = jnp.zeros((length, d_model), dtype=jnp.float32)
    pe = pe.at[:, 0::2].set(jnp.sin(angles))
    pe = pe.at[:, 1::2].set(jnp.cos(angles))
    return pe


def _add_pe_kernel(x_ref, pe_ref, o_ref):
    # x_ref: (tb, ts, Dg); pe_ref: (ts, Dg) -> broadcast add over the batch block.
    o_ref[...] = (x_ref[...] + pe_ref[...]).astype(o_ref.dtype)


def positional_encoding_forward(x: jnp.ndarray, pe_grouped: jnp.ndarray, group: int) -> jnp.ndarray:
    """x: (B, S, D). pe_grouped: (Lg, D*group), pre-grouped & pre-cast pe buffer."""
    B, S, D = x.shape
    Lg, Dg = pe_grouped.shape
    assert Dg == D * group, f"grouped d_model mismatch: {Dg} != {D} * {group}"
    assert S <= Lg * group, f"seq_len {S} > pe buffer length {Lg * group}"

    itemsize = jnp.dtype(x.dtype).itemsize

    # ---- tiny-call bypass: kernel-launch overhead dwarfs the work ----------------
    if B * S * D * itemsize < _MIN_PALLAS_BYTES:
        pe_rows = pe_grouped.reshape(Lg * group, D)[:S]
        return x + pe_rows[None, :, :]

    # ---- lane-dense regrouping (free row-major reshape) --------------------------
    # Pad S to a multiple of 8*group so that after folding `group` rows into the
    # lane axis, the seq-block dim is a multiple of 8 for BOTH x and the pe buffer.
    align = _SUBLANE * group
    S_pad = pl.cdiv(S, align) * align
    if S_pad != S:
        x = jnp.pad(x, ((0, 0), (0, S_pad - S), (0, 0)))
    Sg = S_pad // group                      # multiple of 8, and <= Lg (buffer is 8*g aligned)
    x_v = x.reshape(B, Sg, Dg)

    # ---- tile selection -----------------------------------------------------------
    row_bytes = Dg * itemsize
    budget_rows = max(_SUBLANE, _TILE_TARGET_BYTES // max(row_bytes, 1))

    if B > 1 and Sg <= budget_rows:
        ts = Sg                                              # whole sequence per block ...
        tb = max(1, min(B, budget_rows // max(Sg, 1)))       # ... fold batch elements in
    else:
        tb = 1
        ts = min(Sg, max(_SUBLANE, (budget_rows // _SUBLANE) * _SUBLANE))

    # Never let the grid collapse to 1-2 steps (no pipelining, idle TensorCore).
    def _steps(ts_, tb_):
        return pl.cdiv(Sg, ts_) * pl.cdiv(B, tb_)

    while _steps(ts, tb) < _MIN_GRID_STEPS:
        if ts > _SUBLANE:
            ts = max(_SUBLANE, ((ts // 2 + _SUBLANE - 1) // _SUBLANE) * _SUBLANE)
        elif tb > 1:
            tb = max(1, tb // 2)
        else:
            break

    grid_s = pl.cdiv(Sg, ts)
    grid_b = pl.cdiv(B, tb)

    # Seq axis parallel (megacore sharding); batch sequential/innermost so the pe
    # block index stays constant across batch steps and Pallas skips re-DMAing pe.
    if grid_s >= 2:
        dim_sem = ("parallel", "arbitrary")
    else:
        dim_sem = ("parallel", "parallel")

    out = pl.pallas_call(
        _add_pe_kernel,
        out_shape=jax.ShapeDtypeStruct((B, Sg, Dg), x.dtype),
        grid_spec=pltpu.PrefetchScalarGridSpec(
            num_scalar_prefetch=0,
            grid=(grid_s, grid_b),                                 # batch innermost
            in_specs=[
                pl.BlockSpec((tb, ts, Dg), lambda s, b: (b, s, 0)),  # x tile
                pl.BlockSpec((ts, Dg), lambda s, b: (s, 0)),         # pe tile, batch-invariant
            ],
            out_specs=pl.BlockSpec((tb, ts, Dg), lambda s, b: (b, s, 0)),
        ),
        compiler_params=pltpu.CompilerParams(
            dimension_semantics=dim_sem,
            vmem_limit_bytes=_VMEM_LIMIT_BYTES,
        ),
    )(x_v, pe_grouped)

    out = out.reshape(B, S_pad, D)
    if S_pad != S:
        out = out[:, :S, :]
    return out


class PositionalEncodingPallas:
    def __init__(self, d_model: int, max_len: int = 5000):
        self.d_model = d_model
        self.max_len = max_len
        self.g = _LANE // math.gcd(d_model, _LANE)      # rows folded into the lane axis
        self._pe_cache = {}                             # dtype-name -> grouped, cast pe
        self._build(max_len)

    def _build(self, length: int) -> None:
        # Buffer length padded to a multiple of 8*g so any in-range seq tile stays in-bounds.
        align = _SUBLANE * self.g
        l_pad = pl.cdiv(length, align) * align
        pe_full = _get_pe(l_pad, self.d_model)                         # (l_pad, D) f32
        self.pe = pe_full[:length]                                     # "registered buffer"
        self._pe_grouped_f32 = pe_full.reshape(l_pad // self.g, self.d_model * self.g)
        self._pe_cache = {jnp.dtype(jnp.float32).name: self._pe_grouped_f32}

    def _pe_grouped_for(self, dtype) -> jnp.ndarray:
        key = jnp.dtype(dtype).name
        buf = self._pe_cache.get(key)
        if buf is None:                                  # cast once per dtype, not per call
            buf = self._pe_grouped_f32.astype(dtype)
            self._pe_cache[key] = buf
        return buf

    def __call__(self, x: jnp.ndarray) -> jnp.ndarray:
        seq_len = x.shape[1]
        # Mirror the torch forward branch: regrow the buffer if seq_len > current length.
        # TODO(synk): host-side (Python) rebuild; under jit this would retrace, same as torch mutating a buffer.
        if seq_len > self.pe.shape[0]:
            self._build(seq_len)
        return positional_encoding_forward(x, self._pe_grouped_for(x.dtype), self.g)


if __name__ == "__main__":
    key = jax.random.PRNGKey(0)
    k1, k2 = jax.random.split(key)

    # 1) Module-scale demo shape (batch=2, seq=8, d_model=32): takes the tiny-call
    #    bypass (fused jnp broadcast add), verified against the reference.
    B, S, D = 2, 8, 32
    module = PositionalEncodingPallas(d_model=D, max_len=64)
    x = jax.random.normal(k1, (B, S, D), dtype=jnp.float32)
    out = jax.block_until_ready(module(x))
    ref = x + module.pe[:S, :][None, :, :]
    assert out.shape == (B, S, D)
    assert jnp.allclose(out, ref, atol=1e-6), "mismatch vs reference (bypass path)"

    # 2) Slightly larger shape that takes the Pallas kernel path
    #    (d_model=96 -> g=4 lane-dense regroup; seq tiled + batch folded).
    B2, S2, D2 = 2, 512, 96
    module2 = PositionalEncodingPallas(d_model=D2, max_len=1024)
    x2 = jax.random.normal(k2, (B2, S2, D2), dtype=jnp.float32)
    out2 = jax.block_until_ready(module2(x2))
    ref2 = x2 + module2.pe[:S2, :][None, :, :]
    assert out2.shape == (B2, S2, D2)
    assert jnp.allclose(out2, ref2, atol=1e-6), "mismatch vs reference (kernel path)"

    print("KERNEL_OK")
</pallas_src>

<mosaic_0001>
module attributes {stable_mosaic.version = 11 : i64} {
  func.func @_add_pe_kernel(%arg0: i32, %arg1: i32, %arg2: memref<2x32x384xf32, #tpu.memory_space<vmem>>, %arg3: memref<32x384xf32, #tpu.memory_space<vmem>>, %arg4: memref<2x32x384xf32, #tpu.memory_space<vmem>>) attributes {dimension_semantics = [#tpu.dimension_semantics<parallel>, #tpu.dimension_semantics<arbitrary>], iteration_bounds = array<i64: 4, 1>, scalar_prefetch = 0 : i64, scratch_operands = 0 : i64, tpu.core_type = #tpu.core_type<tc>, window_params = [{transform_indices = @transform_0, window_bounds = array<i64: 2, 32, 384>}, {transform_indices = @transform_1, window_bounds = array<i64: 32, 384>}, {transform_indices = @transform_2, window_bounds = array<i64: 2, 32, 384>}]} {
    %c0 = arith.constant 0 : index
    %c0_0 = arith.constant 0 : index
    %c0_1 = arith.constant 0 : index
    %0 = vector.load %arg2[%c0, %c0_0, %c0_1] : memref<2x32x384xf32, #tpu.memory_space<vmem>>, vector<2x32x384xf32>
    %c0_2 = arith.constant 0 : index
    %c0_3 = arith.constant 0 : index
    %1 = vector.load %arg3[%c0_2, %c0_3] : memref<32x384xf32, #tpu.memory_space<vmem>>, vector<32x384xf32>
    %2 = vector.shape_cast %1 : vector<32x384xf32> to vector<1x32x384xf32>
    %3 = vector.broadcast %2 : vector<1x32x384xf32> to vector<2x32x384xf32>
    %4 = arith.addf %0, %3 : vector<2x32x384xf32>
    %c0_4 = arith.constant 0 : index
    %c0_5 = arith.constant 0 : index
    %c0_6 = arith.constant 0 : index
    %5 = vector.load %arg4[%c0_4, %c0_5, %c0_6] : memref<2x32x384xf32, #tpu.memory_space<vmem>>, vector<2x32x384xf32>
    tpu.vector_store %arg4[%c0_4, %c0_5, %c0_6], %4 {strides = array<i32>} : memref<2x32x384xf32, #tpu.memory_space<vmem>>, vector<2x32x384xf32>,
    return
  }
  func.func @transform_0(%arg0: i32, %arg1: i32) -> (i32, i32, i32) {
    %c0_i32 = arith.constant 0 : i32
    %c0_i32_0 = arith.constant 0 : i32
    return %arg1, %arg0, %c0_i32 : i32, i32, i32
  }
  func.func @transform_1(%arg0: i32, %arg1: i32) -> (i32, i32) {
    %c0_i32 = arith.constant 0 : i32
    %c0_i32_0 = arith.constant 0 : i32
    return %arg0, %c0_i32 : i32, i32
  }
  func.func @transform_2(%arg0: i32, %arg1: i32) -> (i32, i32, i32) {
    %c0_i32 = arith.constant 0 : i32
    %c0_i32_0 = arith.constant 0 : i32
    return %arg1, %arg0, %c0_i32 : i32, i32, i32
  }
}

</mosaic_0001>

<llo_original>
// kernel: tpu_custom_call.1
$region0: #{tpu_custom_call.1}
  #allocation0 [shape = 'u32[]', space=smem, size = 0x4, offset = 0x4, fixed_abs, tag = 'smem constant byte address 0x4 - core index']
  #allocation1 [shape = 'u32[144,128]{1,0:T(1,128)}', space=vmem, size = 0x12000, scoped, tag = 'internal scratch']
  #allocation8 [shape = 's32[]', space=sflag, size = 0x4, offset = 0, fixed_abs, tag = 'sflag constant byte address 0x0 - dummy sync flag']
  #allocation10 [shape = 's32[]', space=sflag, size = 0x4, offset = 0, fixed_abs, tag = 'sflag constant byte address 0x0 - dummy sync flag']
  %s0 = inlined_call_operand.hbm [shape: f32[2,128,384], index: 0, kind: input, shape index: {}]
  %s1 = inlined_call_operand.hbm [shape: f32[256,384], index: 1, kind: input, shape index: {}]
  %s2 = inlined_call_operand.hbm [shape: f32[2,128,384], index: 2, kind: output, shape index: {}]
  %s3 = sld [smem:[#allocation0]]
  $region49: #{tpu_custom_call.1} parent=0
    _
  %s5 = ssub.s32 1, %s3
  %s6 = scalar_select 0, %s5, %s3
  $region1: #{tpu_custom_call.1} parent=0
    #allocation2 [shape = 'u8[196608]{0}', space=vmem, size = 0x30000, scoped, tag = 'input window, operand 0']
    #allocation3 [shape = 's32[2]{0}', space=sflag, size = 0x8, scoped, tag = 'scoped memory for tpu_custom_call.1']
    #allocation4 [shape = 's32[2]{0}', space=sflag, size = 0x8, scoped, tag = 'scoped memory for tpu_custom_call.1']
    #allocation5 [shape = 'u8[98304]{0}', space=vmem, size = 0x18000, scoped, tag = 'input window, operand 1']
    #allocation6 [shape = 's32[2]{0}', space=sflag, size = 0x8, scoped, tag = 'scoped memory for tpu_custom_call.1']
    #allocation7 [shape = 'u8[196608]{0}', space=vmem, size = 0x30000, scoped, tag = 'output window, operand 0']
    %7 = vsyncpa [#allocation3], 0
    %s8 = scalar_lea.sflag [#allocation3], 1
    %9 = vsyncpa %s8, 0
    %10 = vsyncpa [#allocation6], 0
    %s11 = scalar_lea.sflag [#allocation6], 1
    %12 = vsyncpa %s11, 0
    %13 = vsyncpa [#allocation4], 0
    %s14 = scalar_lea.sflag [#allocation4], 1
    %15 = vsyncpa %s14, 0
    loop: start=0, step=1, limit=6
    $region2: #{tpu_custom_call.1} parent=1 // loop_pre_header
      _
    $region3: #{tpu_custom_call.1} parent=1 // loop_header
      %s17 = sphi 0, %s21
      %p18 = scmp.ge.s32.totalorder %s17, 6
      %s24 = sphi 0, %s36
      %s25 = sphi 0, %s32
      %s26 = sphi 0, %s24
      %s27 = sphi 0, %s25
      %s28 = sphi 0, %s26
      %s29 = sphi 0, %s27
      %s41 = sphi 0, %s43
      %s44 = sphi 0, %s41
      %s45 = sphi 0, %s44
      %s61 = sphi 0, %s45
      %s67 = sphi 0, %s69
      %s70 = sphi 0, %s67
      %s71 = sphi 0, %s70
      %s87 = sphi 0, %s71
      %s95 = sphi 0, %s97
      %s98 = sphi 0, %s95
      %s99 = sphi 0, %s98
      %s115 = sphi 0, %s99
    $region4: #{tpu_custom_call.1} parent=1 // loop_header_branch
      %20 = sbr.rel (%p18) target = $region8
    $region5: #{tpu_custom_call.1} parent=1 // loop_body
      %s22 = ssub.s32 %s17, 1
      %s23 = ssub.s32 %s17, 2
      %s30 = sadd.s32 1, %s25
      %p31 = scmp.ge.s32.totalorder %s30, 1
      %s32 = scalar_select %p31, 0, %s30
      %s33 = sadd.s32 1, %s24
      %s34 = scalar_select %p31, %s33, %s24
      %p35 = scmp.ge.s32.totalorder %s34, 4
      %s36 = scalar_select %p35, 0, %s34
      %s37 = ssub.s32 %s25, %s32
      %s38 = ssub.s32 %s24, %s36
      %s39 = sor.u32 %s37, %s38
      %p40 = scmp.eq.s32.totalorder %s39, 0
      %s42 = sadd.s32 %s41, 1
      %s43 = scalar_select %p40, %s41, %s42
      %p46 = pneg %p40
      %p47 = scmp.eq.s32.totalorder %s17, 3
      %p48 = por %p46, %p47
      %p49 = scmp.ne.s32.totalorder %s41, %s44
      %p50 = scmp.eq.s32.totalorder %s17, 0
      %p51 = por %p49, %p50
      %p52 = scmp.ne.s32.totalorder %s41, %s44
      %p53 = scmp.eq.s32.totalorder %s22, 3
      %p54 = por %p52, %p53
      %p55 = scmp.ne.s32.totalorder %s44, %s45
      %p56 = scmp.eq.s32.totalorder %s22, 0
      %p57 = por %p55, %p56
      %p58 = scmp.ne.s32.totalorder %s44, %s45
      %p59 = scmp.eq.s32.totalorder %s23, 3
      %p60 = por %p58, %p59
      %p62 = scmp.ne.s32.totalorder %s45, %s61
      %p63 = scmp.eq.s32.totalorder %s23, 0
      %p64 = por %p62, %p63
      %s65 = ssub.s32 %s24, %s36
      %p66 = scmp.eq.s32.totalorder %s65, 0
      %s68 = sadd.s32 %s67, 1
      %s69 = scalar_select %p66, %s67, %s68
      %p72 = pneg %p66
      %p73 = scmp.eq.s32.totalorder %s17, 3
      %p74 = por %p72, %p73
      %p75 = scmp.ne.s32.totalorder %s67, %s70
      %p76 = scmp.eq.s32.totalorder %s17, 0
      %p77 = por %p75, %p76
      %p78 = scmp.ne.s32.totalorder %s67, %s70
      %p79 = scmp.eq.s32.totalorder %s22, 3
      %p80 = por %p78, %p79
      %p81 = scmp.ne.s32.totalorder %s70, %s71
      %p82 = scmp.eq.s32.totalorder %s22, 0
      %p83 = por %p81, %p82
      %p84 = scmp.ne.s32.totalorder %s70, %s71
      %p85 = scmp.eq.s32.totalorder %s23, 3
      %p86 = por %p84, %p85
      %p88 = scmp.ne.s32.totalorder %s71, %s87
      %p89 = scmp.eq.s32.totalorder %s23, 0
      %p90 = por %p88, %p89
      %s91 = ssub.s32 %s25, %s32
      %s92 = ssub.s32 %s24, %s36
      %s93 = sor.u32 %s91, %s92
      %p94 = scmp.eq.s32.totalorder %s93, 0
      %s96 = sadd.s32 %s95, 1
      %s97 = scalar_select %p94, %s95, %s96
      %p100 = pneg %p94
      %p101 = scmp.eq.s32.totalorder %s17, 3
      %p102 = por %p100, %p101
      %p103 = scmp.ne.s32.totalorder %s95, %s98
      %p104 = scmp.eq.s32.totalorder %s17, 0
      %p105 = por %p103, %p104
      %p106 = scmp.ne.s32.totalorder %s95, %s98
      %p107 = scmp.eq.s32.totalorder %s22, 3
      %p108 = por %p106, %p107
      %p109 = scmp.ne.s32.totalorder %s98, %s99
      %p110 = scmp.eq.s32.totalorder %s22, 0
      %p111 = por %p109, %p110
      %p112 = scmp.ne.s32.totalorder %s98, %s99
      %p113 = scmp.eq.s32.totalorder %s23, 3
      %p114 = por %p112, %p113
      %p116 = scmp.ne.s32.totalorder %s99, %s115
      %p117 = scmp.eq.s32.totalorder %s23, 0
      %p118 = por %p116, %p117
      %p119 = scmp.le.s32.totalorder 1, %s17
      %p120 = scmp.lt.s32.totalorder %s17, 5
      %p121 = pnand %p119, %p120
      %p122 = pneg %p121
      // Predicated region
      $region9: #{tpu_custom_call.1} parent=5 // pred_check
        _
      $region10: #{tpu_custom_call.1} parent=5 // pred_check_branch
        %124 = sbr.rel (%p121) target = $region12
      $region11: #{tpu_custom_call.1} parent=5 // pred_region
        %s125 = ssub.s32 %s17, 1
      $region12: #{tpu_custom_call.1} parent=5 // pred_fallthru
        _
      %p126 = scmp.lt.s32.totalorder %s17, 4
      // Predicated region
      $region13: #{tpu_custom_call.1} parent=5 // pred_check
        %p127 = pneg %p126
      $region14: #{tpu_custom_call.1} parent=5 // pred_check_branch
        %129 = sbr.rel (%p127) target = $region16
      $region15: #{tpu_custom_call.1} parent=5 // pred_region
        // Predicated region
        $region17: #{tpu_custom_call.1} parent=15 // pred_check
          %p130 = pneg %p51
        $region18: #{tpu_custom_call.1} parent=15 // pred_check_branch
          %132 = sbr.rel (%p130) target = $region20
        $region19: #{tpu_custom_call.1} parent=15 // pred_region
          #allocation9 [shape = 'u32[6]{0}', space=smem, size = 0x18, scoped, tag = 'DMA stride descriptor']
          %s133 = sand.u32 %s41, 1
          %s134 = scalar_lea.sflag [#allocation3], %s133
          %s135 = sand.u32 %s41, 1
          %s136 = smul.addr %s135, 192
          %s137 = scalar_lea.vmem [#allocation2], %s136
          %s138 = smul.u32 2, %s25
          %s139 = smul.u32 4, %s24
          %s141 = ssub.s32 3072, 3072
          %142 = vsyncadd %s134, %s141
          %s143 = smul.addr %s139, 3
          %s144 = smul.addr %s138, 48
          %s145 = sadd.s32 %s143, %s144
          %s146 = smul.addr %s145, 128
          %s147 = scalar_lea.hbm %s0, %s146
          %s149 = sshll.u32 1, 14
          %s150 = sxor.u32 4294967295, %s149
          %s152 = sld [smem:[#allocation0]]
          %s153 = sadd.s32 2, %s152
          %s155 = sshll.u32 7, 26
          %s156 = sxor.u32 4294967295, %s155
          %s157 = sand.u32 0, %s156
          %s158 = sshll.u32 %s153, 26
          %s159 = sor.u32 %s157, %s158
          %s160 = sshll.u32 %s137, 4
          %s161 = int_to_ptr.vmem [resolvable:$true] %s160
          %167 = sst [smem:[#allocation9]] 6144
          %s168 = scalar_lea.smem [#allocation9], 1
          %169 = sst [smem:[%s168]] 1536
          %s170 = scalar_lea.smem [#allocation9], 2
          %171 = sst [smem:[%s170]] 4
          %s172 = scalar_lea.smem [#allocation9], 3
          %173 = sst [smem:[%s172]] 384
          %s174 = scalar_lea.smem [#allocation9], 4
          %175 = sst [smem:[%s174]] 384
          %s176 = scalar_lea.smem [#allocation9], 5
          %177 = sst [smem:[%s176]] 24
          %179 = dma.general %s147, 3072, %s161, %s134, [#allocation8], [#allocation9], %s159, 0
        $region20: #{tpu_custom_call.1} parent=15 // pred_fallthru
          _
        // Predicated region
        $region21: #{tpu_custom_call.1} parent=15 // pred_check
          %p180 = pneg %p77
        $region22: #{tpu_custom_call.1} parent=15 // pred_check_branch
          %182 = sbr.rel (%p180) target = $region24
        $region23: #{tpu_custom_call.1} parent=15 // pred_region
          %s183 = sand.u32 %s67, 1
          %s184 = scalar_lea.sflag [#allocation6], %s183
          %s185 = sand.u32 %s67, 1
          %s186 = smul.addr %s185, 96
          %s187 = scalar_lea.vmem [#allocation5], %s186
          %s188 = smul.u32 4, %s24
          %s190 = ssub.s32 1536, 1536
          %191 = vsyncadd %s184, %s190
          %s192 = smul.addr %s188, 3
          %s193 = smul.addr %s192, 128
          %s194 = scalar_lea.hbm %s1, %s193
          %s195 = sshll.u32 %s187, 4
          %s196 = int_to_ptr.vmem [resolvable:$true] %s195
          %201 = dma.hbm_to_vmem [thread:$0]  %s194, 1536, %s196, %s184, 384, 384, 24
        $region24: #{tpu_custom_call.1} parent=15 // pred_fallthru
          _
      $region16: #{tpu_custom_call.1} parent=5 // pred_fallthru
        _
      %p202 = scmp.le.s32.totalorder 1, %s17
      %p203 = scmp.lt.s32.totalorder %s17, 5
      %p204 = pnand %p202, %p203
      %p205 = pneg %p204
      // Predicated region
      $region25: #{tpu_custom_call.1} parent=5 // pred_check
        _
      $region26: #{tpu_custom_call.1} parent=5 // pred_check_branch
        %207 = sbr.rel (%p204) target = $region28
      $region27: #{tpu_custom_call.1} parent=5 // pred_region
        %s208 = ssub.s32 %s17, 1
        %s209 = sand.u32 %s44, 1
        %s210 = scalar_lea.sflag [#allocation3], %s209
        %s211 = sand.u32 %s44, 1
        %s212 = smul.addr %s211, 192
        %s213 = scalar_lea.vmem [#allocation2], %s212
        // Predicated region
        $region29: #{tpu_custom_call.1} parent=27 // pred_check
          %p214 = pneg %p57
        $region30: #{tpu_custom_call.1} parent=27 // pred_check_branch
          %216 = sbr.rel (%p214) target = $region32
        $region31: #{tpu_custom_call.1} parent=27 // pred_region
          %217 = dma.done %s210, 3072
        $region32: #{tpu_custom_call.1} parent=27 // pred_fallthru
          _
        %s218 = sand.u32 %s70, 1
        %s219 = scalar_lea.sflag [#allocation6], %s218
        %s220 = sand.u32 %s70, 1
        %s221 = smul.addr %s220, 96
        %s222 = scalar_lea.vmem [#allocation5], %s221
        // Predicated region
        $region33: #{tpu_custom_call.1} parent=27 // pred_check
          %p223 = pneg %p83
        $region34: #{tpu_custom_call.1} parent=27 // pred_check_branch
          %225 = sbr.rel (%p223) target = $region36
        $region35: #{tpu_custom_call.1} parent=27 // pred_region
          %226 = dma.done %s219, 1536
        $region36: #{tpu_custom_call.1} parent=27 // pred_fallthru
          _
        %s227 = sand.u32 %s44, 1
        %s228 = scalar_lea.sflag [#allocation3], %s227
        %s229 = sand.u32 %s44, 1
        %s230 = smul.addr %s229, 192
        %s231 = scalar_lea.vmem [#allocation2], %s230
        %p232 = pneg %p57
        %p233 = pneg %p54
        %s234 = sand.u32 %s70, 1
        %s235 = scalar_lea.sflag [#allocation6], %s234
        %s236 = sand.u32 %s70, 1
        %s237 = smul.addr %s236, 96
        %s238 = scalar_lea.vmem [#allocation5], %s237
        %p239 = pneg %p83
        %p240 = pneg %p80
        %p241 = pneg %p111
        %p242 = pneg %p108
        %s243 = sand.u32 %s98, 1
        %s244 = scalar_lea.sflag [#allocation4], %s243
        %s245 = sand.u32 %s98, 1
        %s246 = smul.addr %s245, 192
        %s247 = scalar_lea.vmem [#allocation7], %s246
        %s248 = smul.u32 2, %s27
        %s249 = smul.u32 4, %s26
        %s250 = smul.u32 4, %s26
        %s251 = smul.u32 2, %s27
        %s252 = smul.u32 4, %s26
        %v253 = vld [vmem:[%s213] sm:$0xff]
        %v254 = vld [vmem:[%s213 + $0x8] sm:$0xff]
        %v255 = vld [vmem:[%s213 + $0x10] sm:$0xff]
        %v256 = vld [vmem:[%s213 + $0x18] sm:$0xff]
        %v257 = vld [vmem:[%s213 + $0x20] sm:$0xff]
        %v258 = vld [vmem:[%s213 + $0x28] sm:$0xff]
        %v259 = vld [vmem:[%s213 + $0x30] sm:$0xff]
        %v260 = vld [vmem:[%s213 + $0x38] sm:$0xff]
        %v261 = vld [vmem:[%s213 + $0x40] sm:$0xff]
        %v262 = vld [vmem:[%s213 + $0x48] sm:$0xff]
        %v263 = vld [vmem:[%s213 + $0x50] sm:$0xff]
        %v264 = vld [vmem:[%s213 + $0x58] sm:$0xff]
        %v265 = vld [vmem:[%s213 + $0x60] sm:$0xff]
        %v266 = vld [vmem:[%s213 + $0x68] sm:$0xff]
        %v267 = vld [vmem:[%s213 + $0x70] sm:$0xff]
        %v268 = vld [vmem:[%s213 + $0x78] sm:$0xff]
        %v269 = vld [vmem:[%s213 + $0x80] sm:$0xff]
        %v270 = vld [vmem:[%s213 + $0x88] sm:$0xff]
        %v271 = vld [vmem:[%s213 + $0x90] sm:$0xff]
        %v272 = vld [vmem:[%s213 + $0x98] sm:$0xff]
        %v273 = vld [vmem:[%s213 + $0xa0] sm:$0xff]
        %v274 = vld [vmem:[%s213 + $0xa8] sm:$0xff]
        %v275 = vld [vmem:[%s213 + $0xb0] sm:$0xff]
        %v276 = vld [vmem:[%s213 + $0xb8] sm:$0xff]
        %v277 = vld [vmem:[%s222] sm:$0xff]
        %v278 = vld [vmem:[%s222 + $0x8] sm:$0xff]
        %v279 = vld [vmem:[%s222 + $0x10] sm:$0xff]
        %v280 = vld [vmem:[%s222 + $0x18] sm:$0xff]
        %v281 = vld [vmem:[%s222 + $0x20] sm:$0xff]
        %v282 = vld [vmem:[%s222 + $0x28] sm:$0xff]
        %v283 = vld [vmem:[%s222 + $0x30] sm:$0xff]
        %v284 = vld [vmem:[%s222 + $0x38] sm:$0xff]
        %v285 = vld [vmem:[%s222 + $0x40] sm:$0xff]
        %v286 = vld [vmem:[%s222 + $0x48] sm:$0xff]
        %v287 = vld [vmem:[%s222 + $0x50] sm:$0xff]
        %v288 = vld [vmem:[%s222 + $0x58] sm:$0xff]
        %v289 = vadd.f32 %v253, %v277
        %v290 = vadd.f32 %v254, %v278
        %v291 = vadd.f32 %v255, %v279
        %v292 = vadd.f32 %v256, %v280
        %v293 = vadd.f32 %v257, %v281
        %v294 = vadd.f32 %v258, %v282
        %v295 = vadd.f32 %v259, %v283
        %v296 = vadd.f32 %v260, %v284
        %v297 = vadd.f32 %v261, %v285
        %v298 = vadd.f32 %v262, %v286
        %v299 = vadd.f32 %v263, %v287
        %v300 = vadd.f32 %v264, %v288
        %v301 = vadd.f32 %v265, %v277
        %v302 = vadd.f32 %v266, %v278
        %v303 = vadd.f32 %v267, %v279
        %v304 = vadd.f32 %v268, %v280
        %v305 = vadd.f32 %v269, %v281
        %v306 = vadd.f32 %v270, %v282
        %v307 = vadd.f32 %v271, %v283
        %v308 = vadd.f32 %v272, %v284
        %v309 = vadd.f32 %v273, %v285
        %v310 = vadd.f32 %v274, %v286
        %v311 = vadd.f32 %v275, %v287
        %v312 = vadd.f32 %v276, %v288
        %313 = vst [vmem:[%s247] sm:$0xff] %v289
        %314 = vst [vmem:[%s247 + $0x8] sm:$0xff] %v290
        %315 = vst [vmem:[%s247 + $0x10] sm:$0xff] %v291
        %316 = vst [vmem:[%s247 + $0x18] sm:$0xff] %v292
        %317 = vst [vmem:[%s247 + $0x20] sm:$0xff] %v293
        %318 = vst [vmem:[%s247 + $0x28] sm:$0xff] %v294
        %319 = vst [vmem:[%s247 + $0x30] sm:$0xff] %v295
        %320 = vst [vmem:[%s247 + $0x38] sm:$0xff] %v296
        %321 = vst [vmem:[%s247 + $0x40] sm:$0xff] %v297
        %322 = vst [vmem:[%s247 + $0x48] sm:$0xff] %v298
        %323 = vst [vmem:[%s247 + $0x50] sm:$0xff] %v299
        %324 = vst [vmem:[%s247 + $0x58] sm:$0xff] %v300
        %325 = vst [vmem:[%s247 + $0x60] sm:$0xff] %v301
        %326 = vst [vmem:[%s247 + $0x68] sm:$0xff] %v302
        %327 = vst [vmem:[%s247 + $0x70] sm:$0xff] %v303
        %328 = vst [vmem:[%s247 + $0x78] sm:$0xff] %v304
        %329 = vst [vmem:[%s247 + $0x80] sm:$0xff] %v305
        %330 = vst [vmem:[%s247 + $0x88] sm:$0xff] %v306
        %331 = vst [vmem:[%s247 + $0x90] sm:$0xff] %v307
        %332 = vst [vmem:[%s247 + $0x98] sm:$0xff] %v308
        %333 = vst [vmem:[%s247 + $0xa0] sm:$0xff] %v309
        %334 = vst [vmem:[%s247 + $0xa8] sm:$0xff] %v310
        %335 = vst [vmem:[%s247 + $0xb0] sm:$0xff] %v311
        %336 = vst [vmem:[%s247 + $0xb8] sm:$0xff] %v312
        %s337 = sand.u32 %s98, 1
        %s338 = scalar_lea.sflag [#allocation4], %s337
        %s339 = sand.u32 %s98, 1
        %s340 = smul.addr %s339, 192
        %s341 = scalar_lea.vmem [#allocation7], %s340
        // Predicated region
        $region37: #{tpu_custom_call.1} parent=27 // pred_check
          %p342 = pneg %p108
        $region38: #{tpu_custom_call.1} parent=27 // pred_check_branch
          %344 = sbr.rel (%p342) target = $region40
        $region39: #{tpu_custom_call.1} parent=27 // pred_region
          #allocation11 [shape = 'u32[6]{0}', space=smem, size = 0x18, scoped, tag = 'DMA stride descriptor']
          %s345 = smul.u32 2, %s27
          %s346 = smul.u32 4, %s26
          %s348 = ssub.s32 3072, 3072
          %349 = vsyncadd %s338, %s348
          %s350 = smul.addr %s346, 3
          %s351 = smul.addr %s345, 48
          %s352 = sadd.s32 %s350, %s351
          %s353 = smul.addr %s352, 128
          %s354 = scalar_lea.hbm %s2, %s353
          %s356 = sshll.u32 1, 14
          %s357 = sxor.u32 4294967295, %s356
          %s360 = sshll.u32 7, 18
          %s361 = sxor.u32 4294967295, %s360
          %s362 = sand.u32 0, %s361
          %s364 = sor.u32 %s362, 0
          %s366 = sshll.u32 3, 24
          %s367 = sxor.u32 4294967295, %s366
          %s368 = sand.u32 %s364, %s367
          %s370 = sor.u32 %s368, 0
          %s371 = sshll.u32 %s341, 4
          %s372 = int_to_ptr.vmem [resolvable:$true] %s371
          %378 = sst [smem:[#allocation11]] 1536
          %s379 = scalar_lea.smem [#allocation11], 1
          %380 = sst [smem:[%s379]] 6144
          %s381 = scalar_lea.smem [#allocation11], 2
          %382 = sst [smem:[%s381]] 4
          %s383 = scalar_lea.smem [#allocation11], 3
          %384 = sst [smem:[%s383]] 384
          %s385 = scalar_lea.smem [#allocation11], 4
          %386 = sst [smem:[%s385]] 384
          %s387 = scalar_lea.smem [#allocation11], 5
          %388 = sst [smem:[%s387]] 24
          %390 = dma.general %s372, 3072, %s354, %s338, [#allocation10], [#allocation11], %s370, 0
        $region40: #{tpu_custom_call.1} parent=27 // pred_fallthru
          _
      $region28: #{tpu_custom_call.1} parent=5 // pred_fallthru
        _
      %p391 = scmp.le.s32.totalorder 2, %s17
      // Predicated region
      $region41: #{tpu_custom_call.1} parent=5 // pred_check
        %p392 = pneg %p391
      $region42: #{tpu_custom_call.1} parent=5 // pred_check_branch
        %394 = sbr.rel (%p392) target = $region44
      $region43: #{tpu_custom_call.1} parent=5 // pred_region
        %s395 = ssub.s32 %s17, 2
        // Predicated region
        $region45: #{tpu_custom_call.1} parent=43 // pred_check
          %p396 = pneg %p114
        $region46: #{tpu_custom_call.1} parent=43 // pred_check_branch
          %398 = sbr.rel (%p396) target = $region48
        $region47: #{tpu_custom_call.1} parent=43 // pred_region
          %s399 = sand.u32 %s99, 1
          %s400 = scalar_lea.sflag [#allocation4], %s399
          %s401 = sand.u32 %s99, 1
          %s402 = smul.addr %s401, 192
          %s403 = scalar_lea.vmem [#allocation7], %s402
          %404 = dma.done %s400, 3072
        $region48: #{tpu_custom_call.1} parent=43 // pred_fallthru
          _
      $region44: #{tpu_custom_call.1} parent=5 // pred_fallthru
        _
    $region6: #{tpu_custom_call.1} parent=1 // loop_footer
      %s21 = sadd.s32 1, %s17
    $region7: #{tpu_custom_call.1} parent=1 // loop_footer_branch
      %16 = sbr.rel target = $region3
    $region8: #{tpu_custom_call.1} parent=1 // loop_exit
      _
    %405 = vsyncpa [#allocation3], 1
    %s406 = scalar_lea.sflag [#allocation3], 1
    %407 = vsyncpa %s406, 1
    %408 = vsyncpa [#allocation6], 1
    %s409 = scalar_lea.sflag [#allocation6], 1
    %410 = vsyncpa %s409, 1
    %411 = vsyncpa [#allocation4], 1
    %s412 = scalar_lea.sflag [#allocation4], 1
    %413 = vsyncpa %s412, 1

</llo_original>
